<compile_context>
chip_gen: v7x
topology: tpu7x:2x2x1
jax: 0.10.0
libtpu: 0.0.40
codegen_flags: <defaults>
</compile_context>

<pallas_src>
import jax
import jax.numpy as jnp
from jax.experimental import pallas as pl
from jax.experimental.pallas import tpu as pltpu


def _round_up(x, m):
    return (x + m - 1) // m * m


# ---------------------------------------------------------------------------
# Kernel 1: global_add_pool as a one-hot MXU matmul, streamed over node tiles.
# ---------------------------------------------------------------------------
def _make_pooling_kernel(n_nodes, tn, tiles_per_split):
    def kernel(batch_ref, x_ref, part_ref):
        p = pl.program_id(0)      # node-range split ("parallel": 2nd TC on v7x)
        k = pl.program_id(1)      # node tile inside the split ("arbitrary")

        @pl.when(k == 0)
        def _():
            part_ref[...] = jnp.zeros_like(part_ref)

        # Global node offset of this tile (un-clamped; fully OOB tiles mask to 0).
        start = (p * tiles_per_split + k) * tn
        b_pad = part_ref.shape[1]

        # Row-validity mask from the *global* node index. Zeroing x is required
        # (a zero one-hot entry alone is not enough: 0 * NaN from garbage tail
        # rows would still propagate through the MXU accumulation).
        row_ids = start + jax.lax.broadcasted_iota(jnp.int32, (tn, 1), 0)   # [tn,1]
        x = jnp.where(row_ids < n_nodes, x_ref[...], 0.0)                   # [tn,D] f32

        batch_ids = batch_ref[...]                                          # [1,tn] i32
        lane_ids = start + jax.lax.broadcasted_iota(jnp.int32, (1, tn), 1)  # [1,tn]
        lane_valid = lane_ids < n_nodes
        graph_iota = jax.lax.broadcasted_iota(jnp.int32, (b_pad, tn), 0)    # [B_pad,tn]
        onehot = ((graph_iota == batch_ids) & lane_valid).astype(jnp.float32)

        # f32 one-hot matmul with f32 accumulation: exact pooling; the kernel is
        # HBM-bound on streaming x, so f32 MXU throughput costs nothing.
        # TODO(synk): on v7x, optionally stream atom_feat as fp8 (e4m3) to halve
        # the dominant HBM read if the accuracy budget allows.
        part_ref[...] += jnp.dot(onehot, x,
                                 preferred_element_type=jnp.float32)[None]

    return kernel


# ---------------------------------------------------------------------------
# Kernel 2: combine per-split partials + f32 MLP(relu) stack + Linear(H -> 1).
# ---------------------------------------------------------------------------
def _make_head_kernel(num_hidden):
    def kernel(*refs):
        part_ref = refs[0]                                   # [S, B_pad, D] f32
        hidden_refs = refs[1:1 + 2 * num_hidden]             # (w, b) pairs, f32
        wo_ref = refs[1 + 2 * num_hidden]                    # [1, H_last] f32
        bo_ref = refs[2 + 2 * num_hidden]                    # [1, 1] f32
        out_ref = refs[3 + 2 * num_hidden]                   # [B_pad, 128] f32

        h = jnp.sum(part_ref[...], axis=0)                   # combine splits: [B_pad, D]
        for li in range(num_hidden):
            w_ref = hidden_refs[2 * li]                      # f32 [in, out]
            b_ref = hidden_refs[2 * li + 1]                  # f32 [1, out]
            h = jnp.dot(h, w_ref[...], preferred_element_type=jnp.float32)
            h = jnp.maximum(h + b_ref[...], 0.0)
        # Linear(H -> 1): per-lane multiply + cross-lane reduce (VPU/XLU); a 1-wide
        # MXU matmul would waste the systolic array.
        out = jnp.sum(h * wo_ref[...], axis=-1, keepdims=True) + bo_ref[...]
        out_ref[...] = jnp.broadcast_to(out, out_ref.shape)  # lane-dense store

    return kernel


def output_layer_forward(atom_feat, batch, params, num_graphs, *,
                         tn=2048, n_splits=2,
                         vmem_limit_bytes=48 * 1024 * 1024):
    """OutputLayer forward. atom_feat: [N, D] f32, batch: [N] int32 in [0, num_graphs)."""
    hidden_params = params[:-2]
    wo, bo = params[-2], params[-1]
    num_hidden = len(hidden_params) // 2

    N, D = atom_feat.shape
    B_pad = _round_up(max(int(num_graphs), 1), 8)            # sublane-aligned graph dim

    # Node tile: multiple of 128 lanes when tiled; whole array if it is small.
    if N <= tn:
        tn = max(N, 1)
    else:
        tn = _round_up(tn, 128)
    num_tiles = pl.cdiv(N, tn)
    n_splits = max(1, min(n_splits, num_tiles))
    tiles_per_split = pl.cdiv(num_tiles, n_splits)

    # Tiny reshape of the i32 ids; NOT a pass over atom_feat.
    batch2d = batch.astype(jnp.int32).reshape(1, N)

    def x_index_map(p, k):
        # Clamp so the DMA stays in bounds; out-of-range tiles are masked in-kernel.
        return (jnp.minimum(p * tiles_per_split + k, num_tiles - 1), 0)

    def b_index_map(p, k):
        return (0, jnp.minimum(p * tiles_per_split + k, num_tiles - 1))

    pool_cost = pl.CostEstimate(
        flops=2 * B_pad * N * D,
        transcendentals=0,
        bytes_accessed=N * D * atom_feat.dtype.itemsize
        + N * 4 + n_splits * B_pad * D * 4,
    )

    # ---- pass 1: streamed pooling ------------------------------------------
    partials = pl.pallas_call(
        _make_pooling_kernel(N, tn, tiles_per_split),
        out_shape=jax.ShapeDtypeStruct((n_splits, B_pad, D), jnp.float32),
        grid_spec=pltpu.PrefetchScalarGridSpec(
            num_scalar_prefetch=0,
            grid=(n_splits, tiles_per_split),
            in_specs=[
                pl.BlockSpec((1, tn), b_index_map),           # graph ids, tiled over N
                pl.BlockSpec((tn, D), x_index_map),           # atom features, f32 stream
            ],
            out_specs=pl.BlockSpec((1, B_pad, D), lambda p, k: (p, 0, 0)),
        ),
        compiler_params=pltpu.CompilerParams(
            dimension_semantics=("parallel", "arbitrary"),    # split -> both TCs on v7x
            vmem_limit_bytes=vmem_limit_bytes,                # <= ~48 MiB: v7x-safe
        ),
        cost_estimate=pool_cost,
    )(batch2d, atom_feat)

    # ---- pass 2: combine + f32 MLP + head (tiny, runs once) -----------------
    head_args = [partials]
    head_specs = [pl.BlockSpec((n_splits, B_pad, D), lambda i: (0, 0, 0))]
    for li in range(num_hidden):
        w = hidden_params[2 * li].astype(jnp.float32)
        b = hidden_params[2 * li + 1].astype(jnp.float32).reshape(1, -1)
        head_args += [w, b]
        head_specs += [pl.BlockSpec(w.shape, lambda i: (0, 0)),
                       pl.BlockSpec(b.shape, lambda i: (0, 0))]
    wo_row = wo.astype(jnp.float32).reshape(1, -1)            # [1, H_last]
    bo_ = bo.astype(jnp.float32).reshape(1, 1)
    head_args += [wo_row, bo_]
    head_specs += [pl.BlockSpec(wo_row.shape, lambda i: (0, 0)),
                   pl.BlockSpec(bo_.shape, lambda i: (0, 0))]

    out_padded = pl.pallas_call(
        _make_head_kernel(num_hidden),
        out_shape=jax.ShapeDtypeStruct((B_pad, 128), jnp.float32),
        grid=(1,),
        in_specs=head_specs,
        out_specs=pl.BlockSpec((B_pad, 128), lambda i: (0, 0)),
        compiler_params=pltpu.CompilerParams(
            dimension_semantics=("arbitrary",),
            vmem_limit_bytes=vmem_limit_bytes,
        ),
    )(*head_args)

    # Note: node ids in [num_graphs, B_pad) pool into padded rows and are dropped
    # here; ids outside [0, B_pad) never match the one-hot and are ignored.
    return out_padded[:num_graphs, :1]


def _glorot(key, fan_in, fan_out):
    limit = (6.0 / (fan_in + fan_out)) ** 0.5
    return jax.random.uniform(key, (fan_in, fan_out), jnp.float32, -limit, limit)


def init_params(key, atom_dim, hidden_dim_list):
    params = []
    in_dim = atom_dim
    keys = jax.random.split(key, len(hidden_dim_list) + 1)
    for k, h in zip(keys[:-1], hidden_dim_list):
        params.append(_glorot(k, in_dim, h))              # W  [in, out]
        params.append(jnp.zeros((1, h), jnp.float32))     # b
        in_dim = h
    params.append(_glorot(keys[-1], in_dim, 1))           # W_out [in, 1]
    params.append(jnp.zeros((1, 1), jnp.float32))         # b_out
    return tuple(params)


def _reference(atom_feat, batch, params, num_graphs):
    w1, b1, w2, b2, wo, bo = params
    pooled = jax.ops.segment_sum(atom_feat, batch, num_segments=num_graphs)
    h = jnp.maximum(pooled @ w1 + b1, 0.0)
    h = jnp.maximum(h @ w2 + b2, 0.0)
    return h @ wo + bo


if __name__ == "__main__":
    key = jax.random.PRNGKey(0)
    k_feat, k_param, k_feat2, k_batch2 = jax.random.split(key, 4)

    # ---- small demo: N=16 atoms, 32 features, 2 graphs ----------------------
    N = 16
    atom_dim = 32
    hidden_dims = [32, 16]
    B = 2

    atom_feat = jax.random.normal(k_feat, (N, atom_dim), jnp.float32)
    batch = jnp.concatenate([jnp.zeros((7,), jnp.int32),
                             jnp.ones((N - 7,), jnp.int32)])
    params = init_params(k_param, atom_dim, hidden_dims)

    out = output_layer_forward(atom_feat, batch, params, B)
    out = jax.block_until_ready(out)
    assert out.shape == (B, 1)
    ref = _reference(atom_feat, batch, params, B)
    assert jnp.allclose(out, ref, atol=1e-3, rtol=1e-3), (out, ref)

    # ---- ragged multi-tile case: exercises masking, clamping and the split ---
    N2, B2 = 300, 5
    atom_feat2 = jax.random.normal(k_feat2, (N2, atom_dim), jnp.float32)
    batch2 = jax.random.randint(k_batch2, (N2,), 0, B2, jnp.int32)
    out2 = output_layer_forward(atom_feat2, batch2, params, B2, tn=128, n_splits=2)
    out2 = jax.block_until_ready(out2)
    ref2 = _reference(atom_feat2, batch2, params, B2)
    assert out2.shape == (B2, 1)
    assert jnp.allclose(out2, ref2, atol=1e-3, rtol=1e-3), (out2, ref2)

    print("KERNEL_OK")
</pallas_src>

<mosaic_0001>
module attributes {stable_mosaic.version = 11 : i64} {
  func.func @kernel(%arg0: i32, %arg1: i32, %arg2: memref<1x16xi32, #tpu.memory_space<vmem>>, %arg3: memref<16x32xf32, #tpu.memory_space<vmem>>, %arg4: memref<1x8x32xf32, #tpu.memory_space<vmem>>) attributes {dimension_semantics = [#tpu.dimension_semantics<parallel>, #tpu.dimension_semantics<arbitrary>], iteration_bounds = array<i64: 1, 1>, scalar_prefetch = 0 : i64, scratch_operands = 0 : i64, tpu.core_type = #tpu.core_type<tc>, window_params = [{transform_indices = @transform_0, window_bounds = array<i64: 1, 16>}, {transform_indices = @transform_1, window_bounds = array<i64: 16, 32>}, {transform_indices = @transform_2, window_bounds = array<i64: 1, 8, 32>}]} {
    %c0_i32 = arith.constant 0 : i32
    %0 = arith.cmpi eq, %arg1, %c0_i32 : i32
    %1 = arith.extui %0 : i1 to i32
    %c0_i32_0 = arith.constant 0 : i32
    %2 = arith.cmpi ne, %1, %c0_i32_0 : i32
    scf.if %2 {
      %cst_13 = arith.constant 0.000000e+00 : f32
      %34 = vector.broadcast %cst_13 : f32 to vector<1x8x32xf32>
      %c0_14 = arith.constant 0 : index
      %c0_15 = arith.constant 0 : index
      %c0_16 = arith.constant 0 : index
      %35 = vector.load %arg4[%c0_14, %c0_15, %c0_16] : memref<1x8x32xf32, #tpu.memory_space<vmem>>, vector<1x8x32xf32>
      tpu.vector_store %arg4[%c0_14, %c0_15, %c0_16], %34 {strides = array<i32>} : memref<1x8x32xf32, #tpu.memory_space<vmem>>, vector<1x8x32xf32>,
    } else {
    }
    %c1_i32 = arith.constant 1 : i32
    %3 = arith.muli %arg0, %c1_i32 : i32
    %4 = arith.addi %3, %arg1 : i32
    %c16_i32 = arith.constant 16 : i32
    %5 = arith.muli %4, %c16_i32 : i32
    %6 = tpu.iota {dimensions = array<i32: 0>} : vector<16x1xi32>
    %7 = vector.broadcast %5 : i32 to vector<16x1xi32>
    %8 = arith.addi %7, %6 : vector<16x1xi32>
    %c16_i32_1 = arith.constant 16 : i32
    %9 = vector.broadcast %c16_i32_1 : i32 to vector<16x1xi32>
    %10 = arith.cmpi slt, %8, %9 : vector<16x1xi32>
    %c0 = arith.constant 0 : index
    %c0_2 = arith.constant 0 : index
    %11 = vector.load %arg3[%c0, %c0_2] : memref<16x32xf32, #tpu.memory_space<vmem>>, vector<16x32xf32>
    %cst = arith.constant 0.000000e+00 : f32
    %12 = vector.shape_cast %10 : vector<16x1xi1> to vector<16x1xi1>
    %13 = vector.broadcast %12 : vector<16x1xi1> to vector<16x32xi1>
    %14 = vector.broadcast %cst : f32 to vector<16x32xf32>
    %15 = arith.select %13, %11, %14 : vector<16x32xi1>, vector<16x32xf32>
    %c0_3 = arith.constant 0 : index
    %c0_4 = arith.constant 0 : index
    %16 = vector.load %arg2[%c0_3, %c0_4] : memref<1x16xi32, #tpu.memory_space<vmem>>, vector<1x16xi32>
    %17 = tpu.iota {dimensions = array<i32: 1>} : vector<1x16xi32>
    %18 = vector.broadcast %5 : i32 to vector<1x16xi32>
    %19 = arith.addi %18, %17 : vector<1x16xi32>
    %c16_i32_5 = arith.constant 16 : i32
    %20 = vector.broadcast %c16_i32_5 : i32 to vector<1x16xi32>
    %21 = arith.cmpi slt, %19, %20 : vector<1x16xi32>
    %22 = tpu.iota {dimensions = array<i32: 0>} : vector<8x16xi32>
    %23 = vector.broadcast %16 : vector<1x16xi32> to vector<8x16xi32>
    %24 = arith.cmpi eq, %22, %23 : vector<8x16xi32>
    %25 = vector.broadcast %21 : vector<1x16xi1> to vector<8x16xi1>
    %26 = arith.andi %24, %25 : vector<8x16xi1>
    %27 = arith.extui %26 : vector<8x16xi1> to vector<8x16xi32>
    %28 = arith.sitofp %27 : vector<8x16xi32> to vector<8x16xf32>
    %c0_6 = arith.constant 0 : index
    %c0_7 = arith.constant 0 : index
    %c0_8 = arith.constant 0 : index
    %29 = vector.load %arg4[%c0_6, %c0_7, %c0_8] : memref<1x8x32xf32, #tpu.memory_space<vmem>>, vector<1x8x32xf32>
    %cst_9 = arith.constant dense<0.000000e+00> : vector<8x32xf32>
    %30 = tpu.matmul %28, %15, %cst_9 {dimension_numbers = #tpu.dot_dimension_numbers<[1], [0], [0], [1], [0, 0, 1, 1], [], []>} : vector<8x16xf32>, vector<16x32xf32>, vector<8x32xf32> -> vector<8x32xf32>
    %31 = vector.shape_cast %30 : vector<8x32xf32> to vector<1x8x32xf32>
    %32 = arith.addf %29, %31 : vector<1x8x32xf32>
    %c0_10 = arith.constant 0 : index
    %c0_11 = arith.constant 0 : index
    %c0_12 = arith.constant 0 : index
    %33 = vector.load %arg4[%c0_10, %c0_11, %c0_12] : memref<1x8x32xf32, #tpu.memory_space<vmem>>, vector<1x8x32xf32>
    tpu.vector_store %arg4[%c0_10, %c0_11, %c0_12], %32 {strides = array<i32>} : memref<1x8x32xf32, #tpu.memory_space<vmem>>, vector<1x8x32xf32>,
    return
  }
  func.func @transform_0(%arg0: i32, %arg1: i32) -> (i32, i32) {
    %c1_i32 = arith.constant 1 : i32
    %0 = arith.muli %arg0, %c1_i32 : i32
    %1 = arith.addi %0, %arg1 : i32
    %c0_i32 = arith.constant 0 : i32
    %2 = arith.minsi %1, %c0_i32 : i32
    %c0_i32_0 = arith.constant 0 : i32
    %c0_i32_1 = arith.constant 0 : i32
    return %c0_i32_0, %2 : i32, i32
  }
  func.func @transform_1(%arg0: i32, %arg1: i32) -> (i32, i32) {
    %c1_i32 = arith.constant 1 : i32
    %0 = arith.muli %arg0, %c1_i32 : i32
    %1 = arith.addi %0, %arg1 : i32
    %c0_i32 = arith.constant 0 : i32
    %2 = arith.minsi %1, %c0_i32 : i32
    %c0_i32_0 = arith.constant 0 : i32
    %c0_i32_1 = arith.constant 0 : i32
    return %2, %c0_i32_0 : i32, i32
  }
  func.func @transform_2(%arg0: i32, %arg1: i32) -> (i32, i32, i32) {
    %c0_i32 = arith.constant 0 : i32
    %c0_i32_0 = arith.constant 0 : i32
    %c0_i32_1 = arith.constant 0 : i32
    return %arg0, %c0_i32, %c0_i32_0 : i32, i32, i32
  }
}

</mosaic_0001>

<llo_original>
// kernel: tpu_custom_call.1
$region0: #{tpu_custom_call.1}
  #allocation0 [shape = 'u32[]', space=smem, size = 0x4, offset = 0x4, fixed_abs, tag = 'smem constant byte address 0x4 - core index']
  #allocation1 [shape = 'u32[144,128]{1,0:T(1,128)}', space=vmem, size = 0x12000, scoped, tag = 'internal scratch']
  %s0 = inlined_call_operand.hbm [shape: s32[1,16], index: 0, kind: input, shape index: {}]
  %s1 = inlined_call_operand.hbm [shape: f32[16,32], index: 1, kind: input, shape index: {}]
  %s2 = inlined_call_operand.hbm [shape: f32[1,8,32], index: 2, kind: output, shape index: {}]
  %s3 = sld [smem:[#allocation0]]
  $region30: #{tpu_custom_call.1} parent=0
    _
  %s5 = ssub.s32 1, %s3
  %s6 = scalar_select 0, %s5, %s3
  $region1: #{tpu_custom_call.1} parent=0
    #allocation2 [shape = 'u8[512]{0}', space=vmem, size = 0x400, scoped, tag = 'input window, operand 0, single buffered']
    #allocation3 [shape = 's32[1]{0}', space=sflag, size = 0x4, scoped, tag = 'scoped memory for tpu_custom_call.1']
    #allocation4 [shape = 's32[1]{0}', space=sflag, size = 0x4, scoped, tag = 'scoped memory for tpu_custom_call.1']
    #allocation5 [shape = 'u8[8192]{0}', space=vmem, size = 0x2000, scoped, tag = 'input window, operand 1, single buffered']
    #allocation6 [shape = 's32[1]{0}', space=sflag, size = 0x4, scoped, tag = 'scoped memory for tpu_custom_call.1']
    #allocation7 [shape = 'u8[4096]{0}', space=vmem, size = 0x1000, scoped, tag = 'output window, operand 0, single buffered']
    %7 = vsyncpa [#allocation3], 0
    %8 = vsyncpa [#allocation6], 0
    %9 = vsyncpa [#allocation4], 0
    // Predicated region
    $region2: #{tpu_custom_call.1} parent=1 // pred_check
      _
    $region3: #{tpu_custom_call.1} parent=1 // pred_check_branch
      %11 = sbr.rel (0) target = $region5
    $region4: #{tpu_custom_call.1} parent=1 // pred_region
      %s12 = sadd.s32 0, 0
      %p13 = scmp.lt.s32.totalorder %s12, 0
      %s14 = scalar_select %p13, %s12, 0
      %s16 = ssub.s32 16, 16
      %17 = vsyncadd [#allocation3], %s16
      %s18 = smul.addr %s14, 16
      %s19 = scalar_lea.hbm %s0, %s18
      %s21 = sshll.u32 [#allocation2], 4
      %s22 = int_to_ptr.vmem [resolvable:$true] %s21
      %24 = dma.hbm_to_vmem [thread:$0]  %s19, 16, %s22, [#allocation3]
    $region5: #{tpu_custom_call.1} parent=1 // pred_fallthru
      _
    // Predicated region
    $region6: #{tpu_custom_call.1} parent=1 // pred_check
      _
    $region7: #{tpu_custom_call.1} parent=1 // pred_check_branch
      %26 = sbr.rel (0) target = $region9
    $region8: #{tpu_custom_call.1} parent=1 // pred_region
      %s27 = sadd.s32 0, 0
      %p28 = scmp.lt.s32.totalorder %s27, 0
      %s29 = scalar_select %p28, %s27, 0
      %s30 = smul.u32 2, %s29
      %s32 = ssub.s32 256, 256
      %33 = vsyncadd [#allocation6], %s32
      %s34 = smul.addr %s30, 128
      %s35 = scalar_lea.hbm %s1, %s34
      %s36 = sshll.u32 [#allocation5], 4
      %s37 = int_to_ptr.vmem [resolvable:$true] %s36
      %42 = dma.hbm_to_vmem [thread:$0]  %s35, 256, %s37, [#allocation6], 128, 128, 8
    $region9: #{tpu_custom_call.1} parent=1 // pred_fallthru
      _
    // Predicated region
    $region10: #{tpu_custom_call.1} parent=1 // pred_check
      _
    $region11: #{tpu_custom_call.1} parent=1 // pred_check_branch
      %44 = sbr.rel (0) target = $region13
    $region12: #{tpu_custom_call.1} parent=1 // pred_region
      %45 = dma.done [#allocation3], 16
    $region13: #{tpu_custom_call.1} parent=1 // pred_fallthru
      _
    // Predicated region
    $region14: #{tpu_custom_call.1} parent=1 // pred_check
      _
    $region15: #{tpu_custom_call.1} parent=1 // pred_check_branch
      %47 = sbr.rel (0) target = $region17
    $region16: #{tpu_custom_call.1} parent=1 // pred_region
      %48 = dma.done [#allocation6], 256
    $region17: #{tpu_custom_call.1} parent=1 // pred_fallthru
      _
    %s49 = sadd.s32 0, 0
    %p50 = scmp.lt.s32.totalorder %s49, 0
    %s51 = scalar_select %p50, %s49, 0
    %s52 = sadd.s32 0, 0
    %p53 = scmp.lt.s32.totalorder %s52, 0
    %s54 = scalar_select %p53, %s52, 0
    %s55 = smul.u32 2, %s54
    %p56 = scmp.eq.s32.totalorder 0, 0
    // Predicated region
    $region18: #{tpu_custom_call.1} parent=1 // pred_check
      %p57 = pneg %p56
    $region19: #{tpu_custom_call.1} parent=1 // pred_check_branch
      %59 = sbr.rel (%p57) target = $region21
    $region20: #{tpu_custom_call.1} parent=1 // pred_region
      %vm60 = vcmask 261120
      %61 = vst.msk [vmem:[#allocation7] sm:$0xff] %vm60, 0.0
    $region21: #{tpu_custom_call.1} parent=1 // pred_fallthru
      _
    %s62 = sadd.s32 0, 0
    %s63 = smul.u32 %s62, 16
    %v64 = vlaneseq
    %v65 = vshrl.u32 %v64, 7
    %v66 = vadd.s32 %v65, 8
    %v67 = vstv %s63
    %v68 = vadd.s32 %v67, %v65
    %v69 = vadd.s32 %v67, %v66
    %vm70 = vcmp.lt.s32.totalorder %v68, 16
    %vm71 = vcmp.lt.s32.totalorder %v69, 16
    %v72 = vld [vmem:[#allocation5] sm:$0xff]
    %v73 = vld [vmem:[#allocation5 + $0x8] sm:$0xff]
    %v74 = vsel %vm70, 1, 0
    %v75 = vsel %vm71, 1, 0
    %vm76 = vcmp.eq.s32.totalorder %v74, 1
    %vm77 = vcmp.eq.s32.totalorder %v75, 1
    %v78 = vsel %vm76, %v72, 0.0
    %v79 = vsel %vm77, %v73, 0.0
    %v80 = vld [vmem:[#allocation2] sm:$0x1]
    %v81 = vlaneseq
    %v82 = vand.u32 %v81, 127
    %v83 = vadd.s32 %v67, %v82
    %vm84 = vcmp.lt.s32.totalorder %v83, 16
    %v85 = vlaneseq
    %v86 = vshrl.u32 %v85, 7
    %v87 = vsub.s32 0, %v86
    %v88 = vrot.slane %v80, %v87
    %vm89 = vcmp.eq.s32.totalorder %v65, %v88
    %v90 = vsel %vm84, 1, 0
    %vm91 = vcmp.eq.s32.totalorder %v90, 1
    %vm92 = vmand %vm89, %vm91
    %v93 = vsel %vm92, 1, 0
    %v94 = vcvt.s32.f32 %v93
    %v95 = vld [vmem:[#allocation7] sm:$0xff]
    %vm96 = vcmask 130048
    %v98 = vsel %vm96, %v94, 0
    %100 = vmatprep.subr.mxu0 0.0
    %101 = vmatpush1.msra.mxu0 %v78
    %102 = vmatprep.subr.mxu0 0.0
    %103 = vmatpush1.msra.mxu0 %v79
    %104 = vmatprep.subr.mxu0 0.0
    %105 = vmatpush1.msra.mxu0 0.0
    %106 = vmatprep.subr.mxu0 0.0
    %107 = vmatpush1.msra.mxu0 0.0
    %108 = vmatprep.subr.mxu0 0.0
    %109 = vmatpush1.msra.mxu0 0.0
    %110 = vmatprep.subr.mxu0 0.0
    %111 = vmatpush1.msra.mxu0 0.0
    %112 = vmatprep.subr.mxu0 0.0
    %113 = vmatpush1.msra.mxu0 0.0
    %114 = vmatprep.subr.mxu0 0.0
    %115 = vmatpush1.msra.mxu0 0.0
    %116 = vmatprep.subr.mxu0 0.0
    %117 = vmatpush1.msra.mxu0 0.0
    %118 = vmatprep.subr.mxu0 0.0
    %119 = vmatpush1.msra.mxu0 0.0
    %120 = vmatprep.subr.mxu0 0.0
    %121 = vmatpush1.msra.mxu0 0.0
    %122 = vmatprep.subr.mxu0 0.0
    %123 = vmatpush1.msra.mxu0 0.0
    %124 = vmatprep.subr.mxu0 0.0
    %125 = vmatpush1.msra.mxu0 0.0
    %126 = vmatprep.subr.mxu0 0.0
    %127 = vmatpush1.msra.mxu0 0.0
    %128 = vmatprep.subr.mxu0 0.0
    %129 = vmatpush1.msra.mxu0 0.0
    %130 = vmatprep.subr.mxu0 0.0
    %131 = vmatpush1.msra.mxu0 0.0
    %132 = vmatprep.subr.mxu0 0.0
    %133 = vmatpush1.msra.mxu0 0.0
    %134 = vmatprep.subr.mxu0 0.0
    %135 = vmatpush1.msra.mxu0 0.0
    %136 = vmatprep.subr.mxu0 0.0
    %137 = vmatpush1.msra.mxu0 0.0
    %138 = vmatprep.subr.mxu0 0.0
    %139 = vmatpush1.msra.mxu0 0.0
    %140 = vmatprep.subr.mxu0 0.0
    %141 = vmatpush1.msra.mxu0 0.0
    %142 = vmatprep.subr.mxu0 0.0
    %143 = vmatpush1.msra.mxu0 0.0
    %144 = vmatprep.subr.mxu0 0.0
    %145 = vmatpush1.msra.mxu0 0.0
    %146 = vmatprep.subr.mxu0 0.0
    %147 = vmatpush1.msra.mxu0 0.0
    %148 = vmatprep.subr.mxu0 0.0
    %149 = vmatpush1.msra.mxu0 0.0
    %150 = vmatprep.subr.mxu0 0.0
    %151 = vmatpush1.msra.mxu0 0.0
    %152 = vmatprep.subr.mxu0 0.0
    %153 = vmatpush1.msra.mxu0 0.0
    %154 = vmatprep.subr.mxu0 0.0
    %155 = vmatpush1.msra.mxu0 0.0
    %156 = vmatprep.subr.mxu0 0.0
    %157 = vmatpush1.msra.mxu0 0.0
    %158 = vmatprep.subr.mxu0 0.0
    %159 = vmatpush1.msra.mxu0 0.0
    %160 = vmatprep.subr.mxu0 0.0
    %161 = vmatpush1.msra.mxu0 0.0
    %162 = vmatprep.subr.mxu0 0.0
    %163 = vmatpush1.msra.mxu0 0.0
    %164 = vmatprep.mubr.f32.mxu0 0.0
    %165 = vmatmul.mubr.f32.gmra.mrb[0].mxu0 %v98
    %v166 = vpop.f32.mrb[0].mxu0
    %v167 = vadd.f32 0.0, %v166
    %v168 = vpop.f32.mrb[0].mxu0
    %169 = vdwg.mxu0
    %v170 = vadd.f32 %v95, %v167
    %vm171 = vcmask 261120
    %172 = vst.msk [vmem:[#allocation7] sm:$0xff] %vm171, %v170
    // Predicated region
    $region22: #{tpu_custom_call.1} parent=1 // pred_check
      _
    $region23: #{tpu_custom_call.1} parent=1 // pred_check_branch
      %174 = sbr.rel (0) target = $region25
    $region24: #{tpu_custom_call.1} parent=1 // pred_region
      %s176 = ssub.s32 128, 128
      %177 = vsyncadd [#allocation4], %s176
      %s179 = sshll.u32 [#allocation7], 4
      %s180 = int_to_ptr.vmem [resolvable:$true] %s179
      %182 = dma.vmem_to_hbm [thread:$0]  %s180, 128, %s2, [#allocation4]
    $region25: #{tpu_custom_call.1} parent=1 // pred_fallthru
      _
    // Predicated region
    $region26: #{tpu_custom_call.1} parent=1 // pred_check
      _
    $region27: #{tpu_custom_call.1} parent=1 // pred_check_branch
      %184 = sbr.rel (0) target = $region29
    $region28: #{tpu_custom_call.1} parent=1 // pred_region
      %185 = dma.done [#allocation4], 128
    $region29: #{tpu_custom_call.1} parent=1 // pred_fallthru
      _
    %186 = vsyncpa [#allocation3], 1
    %187 = vsyncpa [#allocation6], 1
    %188 = vsyncpa [#allocation4], 1

</llo_original>
